<compile_context>
chip_gen: v7x
topology: tpu7x:2x2x1
jax: 0.10.0
libtpu: 0.0.40
codegen_flags: <defaults>
</compile_context>

<pallas_src>
import jax
import jax.numpy as jnp
from jax.experimental import pallas as pl
from jax.experimental.pallas import tpu as pltpu


_LANES = 128              # vreg lane width
_MIN_ROWS_PER_CORE = 256  # only split a single tile across 2 TCs above this


def _round_up(n: int, m: int) -> int:
    return ((n + m - 1) // m) * m


def _classifier_kernel(x_ref, w1_ref, b1_ref, w2_ref, b2_ref, o_ref):
    """One batch tile of the classifier head.

    x_ref  : (TB, S, H)   feature dtype  -- raw features; CLS row sliced here
    w1_ref : (H, H)       compute dtype  -- dense weight, stored (in, out)
    b1_ref : (1, H)       f32            -- dense bias
    w2_ref : (H, C_pad)   compute dtype  -- out_proj weight, lane padded
    b2_ref : (1, C_pad)   f32            -- out_proj bias, lane padded
    o_ref  : (TB, C_pad)  compute dtype  -- padded logits
    """
    # CLS token only; cast to the MXU dtype in-kernel (VPU has huge slack).
    x = x_ref[:, 0, :].astype(w1_ref.dtype)                       # (TB, H)
    h = jnp.dot(x, w1_ref[...], preferred_element_type=jnp.float32)
    h = jnp.tanh(h + b1_ref[...])                                 # bias+tanh in f32
    h = h.astype(w2_ref.dtype)                                    # back to MXU dtype
    logits = jnp.dot(h, w2_ref[...], preferred_element_type=jnp.float32)
    o_ref[...] = (logits + b2_ref[...]).astype(o_ref.dtype)       # f32 bias, then store


def depression_classifier_forward(features, w_dense, b_dense, w_out, b_out,
                                  *, compute_dtype=jnp.bfloat16, block_b=1024):
    """features: (B, S, H). Weights stored as (in, out). Returns (B, 6) logits."""
    B, S, H = features.shape
    C = w_out.shape[1]

    # Lane-dense output: pad the class dim to 128 lanes (zero weight/bias cols).
    c_pad = _round_up(C, _LANES)
    w1 = w_dense.astype(compute_dtype)
    b1 = b_dense.reshape(1, H).astype(jnp.float32)
    w2 = jnp.pad(w_out, ((0, 0), (0, c_pad - C))).astype(compute_dtype)
    b2 = jnp.pad(b_out, (0, c_pad - C)).reshape(1, c_pad).astype(jnp.float32)

    # Output written back in the compute dtype (bf16 default halves the
    # dominant HBM writeback stream); f32 path keeps bit-tight checks.
    out_dtype = jnp.dtype(compute_dtype)
    row_align = 8 * max(1, 4 // out_dtype.itemsize)   # 8 for f32, 16 for bf16

    # Batch tile: as large as possible (amortize per-step overhead), aligned to
    # the output sublane granularity.  No explicit batch pad -- the grid is
    # cdiv(B, tb) and Pallas masks the ragged last block.
    tb = min(block_b, _round_up(max(B, row_align), row_align))
    # v7x has 2 TensorCores: if one tile would swallow a large batch, split it
    # so dimension_semantics=("parallel",) actually feeds both cores.
    if pl.cdiv(B, tb) == 1 and B >= 2 * _MIN_ROWS_PER_CORE:
        tb = _round_up(pl.cdiv(B, 2), row_align)
    grid = (pl.cdiv(B, tb),)

    padded = pl.pallas_call(
        _classifier_kernel,
        out_shape=jax.ShapeDtypeStruct((B, c_pad), out_dtype),
        grid=grid,
        in_specs=[
            pl.BlockSpec((tb, S, H), lambda i: (i, 0, 0)),   # raw features tile
            pl.BlockSpec((H, H), lambda i: (0, 0)),          # dense weight
            pl.BlockSpec((1, H), lambda i: (0, 0)),          # dense bias
            pl.BlockSpec((H, c_pad), lambda i: (0, 0)),      # out_proj weight
            pl.BlockSpec((1, c_pad), lambda i: (0, 0)),      # out_proj bias
        ],
        out_specs=pl.BlockSpec((tb, c_pad), lambda i: (i, 0)),
        compiler_params=pltpu.CompilerParams(
            dimension_semantics=("parallel",)),
    )(features, w1, b1, w2, b2)

    # Strip the lane padding only (no batch padding was added).
    return padded[:, :C].astype(features.dtype)


def _reference_forward(features, w_dense, b_dense, w_out, b_out):
    x = features[:, 0, :]
    x = jnp.tanh(x @ w_dense + b_dense)
    return x @ w_out + b_out


if __name__ == "__main__":
    # Small shapes consistent with the module: batch=2, seq=8, hidden=32, classes=6.
    B, S, H, C = 2, 8, 32, 6

    key = jax.random.PRNGKey(0)
    k_feat, k_w1, k_b1, k_w2, k_b2, k_feat2 = jax.random.split(key, 6)

    features = jax.random.normal(k_feat, (B, S, H), dtype=jnp.float32)

    # PyTorch Linear stores W as (out, in); we store the transpose (in, out)
    # so the kernel computes x @ W.
    w_dense = jax.random.normal(k_w1, (H, H), dtype=jnp.float32) * 0.05
    b_dense = jax.random.normal(k_b1, (H,), dtype=jnp.float32) * 0.05
    w_out = jax.random.normal(k_w2, (H, C), dtype=jnp.float32) * 0.05
    b_out = jax.random.normal(k_b2, (C,), dtype=jnp.float32) * 0.05

    ref = _reference_forward(features, w_dense, b_dense, w_out, b_out)

    # 1) f32 compute path: tight check against the JAX reference (also
    #    exercises the ragged edge block: B=2 rows inside a tb=8 tile).
    logits_f32 = depression_classifier_forward(
        features, w_dense, b_dense, w_out, b_out, compute_dtype=jnp.float32)
    logits_f32 = jax.block_until_ready(logits_f32)
    assert logits_f32.shape == (B, C)
    assert jnp.allclose(logits_f32, ref, atol=1e-5, rtol=1e-5), "f32 mismatch vs reference"

    # 2) Default bf16-MXU path (bf16 operands + bf16 writeback, f32 accum):
    #    loose check.
    logits_bf16 = depression_classifier_forward(
        features, w_dense, b_dense, w_out, b_out)
    logits_bf16 = jax.block_until_ready(logits_bf16)
    assert logits_bf16.shape == (B, C)
    assert jnp.allclose(logits_bf16, ref, atol=2e-2, rtol=2e-2), "bf16 mismatch vs reference"

    # 3) Multi-step grid + ragged last block (B=300, tb=128 -> grid=3, tail=44
    #    rows) to validate the cdiv-grid masking path.
    B2 = 300
    features2 = jax.random.normal(k_feat2, (B2, S, H), dtype=jnp.float32)
    ref2 = _reference_forward(features2, w_dense, b_dense, w_out, b_out)
    logits2 = depression_classifier_forward(
        features2, w_dense, b_dense, w_out, b_out,
        compute_dtype=jnp.float32, block_b=128)
    logits2 = jax.block_until_ready(logits2)
    assert logits2.shape == (B2, C)
    assert jnp.allclose(logits2, ref2, atol=1e-4, rtol=1e-4), "ragged-grid mismatch vs reference"

    print("KERNEL_OK")
</pallas_src>

<mosaic_0001>
module attributes {stable_mosaic.version = 11 : i64} {
  func.func @_classifier_kernel(%arg0: i32, %arg1: memref<8x8x32xf32, #tpu.memory_space<vmem>>, %arg2: memref<32x32xf32, #tpu.memory_space<vmem>>, %arg3: memref<1x32xf32, #tpu.memory_space<vmem>>, %arg4: memref<32x128xf32, #tpu.memory_space<vmem>>, %arg5: memref<1x128xf32, #tpu.memory_space<vmem>>, %arg6: memref<8x128xf32, #tpu.memory_space<vmem>>) attributes {dimension_semantics = [#tpu.dimension_semantics<parallel>], iteration_bounds = array<i64: 1>, scalar_prefetch = 0 : i64, scratch_operands = 0 : i64, tpu.core_type = #tpu.core_type<tc>, window_params = [{transform_indices = @transform_0, window_bounds = array<i64: 8, 8, 32>}, {pipeline_mode = #tpu.pipeline_mode<synchronous>, transform_indices = @transform_1, window_bounds = array<i64: 32, 32>}, {pipeline_mode = #tpu.pipeline_mode<synchronous>, transform_indices = @transform_2, window_bounds = array<i64: 1, 32>}, {pipeline_mode = #tpu.pipeline_mode<synchronous>, transform_indices = @transform_3, window_bounds = array<i64: 32, 128>}, {pipeline_mode = #tpu.pipeline_mode<synchronous>, transform_indices = @transform_4, window_bounds = array<i64: 1, 128>}, {transform_indices = @transform_5, window_bounds = array<i64: 8, 128>}]} {
    %c0 = arith.constant 0 : index
    %c0_0 = arith.constant 0 : index
    %c0_1 = arith.constant 0 : index
    %0 = vector.load %arg1[%c0, %c0_0, %c0_1] : memref<8x8x32xf32, #tpu.memory_space<vmem>>, vector<8x1x32xf32>
    %1 = vector.shape_cast %0 : vector<8x1x32xf32> to vector<8x32xf32>
    %c0_2 = arith.constant 0 : index
    %c0_3 = arith.constant 0 : index
    %2 = vector.load %arg2[%c0_2, %c0_3] : memref<32x32xf32, #tpu.memory_space<vmem>>, vector<32x32xf32>
    %cst = arith.constant dense<0.000000e+00> : vector<8x32xf32>
    %3 = tpu.matmul %1, %2, %cst {dimension_numbers = #tpu.dot_dimension_numbers<[1], [0], [0], [1], [0, 0, 1, 1], [], []>} : vector<8x32xf32>, vector<32x32xf32>, vector<8x32xf32> -> vector<8x32xf32>
    %c0_4 = arith.constant 0 : index
    %c0_5 = arith.constant 0 : index
    %4 = vector.load %arg3[%c0_4, %c0_5] : memref<1x32xf32, #tpu.memory_space<vmem>>, vector<1x32xf32>
    %5 = vector.broadcast %4 : vector<1x32xf32> to vector<8x32xf32>
    %6 = arith.addf %3, %5 : vector<8x32xf32>
    %7 = math.tanh %6 : vector<8x32xf32>
    %c0_6 = arith.constant 0 : index
    %c0_7 = arith.constant 0 : index
    %8 = vector.load %arg4[%c0_6, %c0_7] : memref<32x128xf32, #tpu.memory_space<vmem>>, vector<32x128xf32>
    %cst_8 = arith.constant dense<0.000000e+00> : vector<8x128xf32>
    %9 = tpu.matmul %7, %8, %cst_8 {dimension_numbers = #tpu.dot_dimension_numbers<[1], [0], [0], [1], [0, 0, 1, 1], [], []>} : vector<8x32xf32>, vector<32x128xf32>, vector<8x128xf32> -> vector<8x128xf32>
    %c0_9 = arith.constant 0 : index
    %c0_10 = arith.constant 0 : index
    %10 = vector.load %arg5[%c0_9, %c0_10] : memref<1x128xf32, #tpu.memory_space<vmem>>, vector<1x128xf32>
    %11 = vector.broadcast %10 : vector<1x128xf32> to vector<8x128xf32>
    %12 = arith.addf %9, %11 : vector<8x128xf32>
    %c0_11 = arith.constant 0 : index
    %c0_12 = arith.constant 0 : index
    %13 = vector.load %arg6[%c0_11, %c0_12] : memref<8x128xf32, #tpu.memory_space<vmem>>, vector<8x128xf32>
    tpu.vector_store %arg6[%c0_11, %c0_12], %12 {strides = array<i32>} : memref<8x128xf32, #tpu.memory_space<vmem>>, vector<8x128xf32>,
    return
  }
  func.func @transform_0(%arg0: i32) -> (i32, i32, i32) {
    %c0_i32 = arith.constant 0 : i32
    %c0_i32_0 = arith.constant 0 : i32
    %c0_i32_1 = arith.constant 0 : i32
    return %arg0, %c0_i32, %c0_i32_0 : i32, i32, i32
  }
  func.func @transform_1(%arg0: i32) -> (i32, i32) {
    %c0_i32 = arith.constant 0 : i32
    %c0_i32_0 = arith.constant 0 : i32
    %c0_i32_1 = arith.constant 0 : i32
    return %c0_i32, %c0_i32_0 : i32, i32
  }
  func.func @transform_2(%arg0: i32) -> (i32, i32) {
    %c0_i32 = arith.constant 0 : i32
    %c0_i32_0 = arith.constant 0 : i32
    %c0_i32_1 = arith.constant 0 : i32
    return %c0_i32, %c0_i32_0 : i32, i32
  }
  func.func @transform_3(%arg0: i32) -> (i32, i32) {
    %c0_i32 = arith.constant 0 : i32
    %c0_i32_0 = arith.constant 0 : i32
    %c0_i32_1 = arith.constant 0 : i32
    return %c0_i32, %c0_i32_0 : i32, i32
  }
  func.func @transform_4(%arg0: i32) -> (i32, i32) {
    %c0_i32 = arith.constant 0 : i32
    %c0_i32_0 = arith.constant 0 : i32
    %c0_i32_1 = arith.constant 0 : i32
    return %c0_i32, %c0_i32_0 : i32, i32
  }
  func.func @transform_5(%arg0: i32) -> (i32, i32) {
    %c0_i32 = arith.constant 0 : i32
    %c0_i32_0 = arith.constant 0 : i32
    return %arg0, %c0_i32 : i32, i32
  }
}

</mosaic_0001>

<llo_original>
// kernel: tpu_custom_call.1
$region0: #{tpu_custom_call.1}
  #allocation0 [shape = 'u32[]', space=smem, size = 0x4, offset = 0x4, fixed_abs, tag = 'smem constant byte address 0x4 - core index']
  #allocation1 [shape = 'u32[144,128]{1,0:T(1,128)}', space=vmem, size = 0x12000, scoped, tag = 'internal scratch']
  %s0 = inlined_call_operand.hbm [shape: f32[2,8,32], index: 0, kind: input, shape index: {}]
  %s1 = inlined_call_operand.hbm [shape: f32[32,32], index: 1, kind: input, shape index: {}]
  %s2 = inlined_call_operand.vmem [shape: f32[1,32], index: 2, kind: input, shape index: {}]
  %s3 = inlined_call_operand.hbm [shape: f32[32,128], index: 3, kind: input, shape index: {}]
  %s4 = inlined_call_operand.vmem [shape: f32[1,128], index: 4, kind: input, shape index: {}]
  %s5 = inlined_call_operand.hbm [shape: f32[2,128], index: 5, kind: output, shape index: {}]
  %s6 = sld [smem:[#allocation0]]
  $region42: #{tpu_custom_call.1} parent=0
    _
  %s8 = ssub.s32 1, %s6
  %s9 = scalar_select 0, %s8, %s6
  $region1: #{tpu_custom_call.1} parent=0
    #allocation2 [shape = 'u8[32768]{0}', space=vmem, size = 0x8000, scoped, tag = 'input window, operand 0, single buffered']
    #allocation3 [shape = 's32[1]{0}', space=sflag, size = 0x4, scoped, tag = 'scoped memory for tpu_custom_call.1']
    #allocation4 [shape = 's32[1]{0}', space=sflag, size = 0x4, scoped, tag = 'scoped memory for tpu_custom_call.1']
    #allocation5 [shape = 'u8[16384]{0}', space=vmem, size = 0x4000, scoped, tag = 'input window, operand 1, single buffered']
    #allocation6 [shape = 's32[1]{0}', space=sflag, size = 0x4, scoped, tag = 'scoped memory for tpu_custom_call.1']
    #allocation7 [shape = 'u8[16384]{0}', space=vmem, size = 0x4000, scoped, tag = 'input window, operand 3, single buffered']
    #allocation8 [shape = 'u8[4096]{0}', space=vmem, size = 0x1000, scoped, tag = 'output window, operand 0, single buffered']
    %10 = vsyncpa [#allocation3], 0
    %11 = vsyncpa [#allocation6], 0
    %12 = vsyncpa [#allocation4], 0
    // Predicated region
    $region2: #{tpu_custom_call.1} parent=1 // pred_check
      _
    $region3: #{tpu_custom_call.1} parent=1 // pred_check_branch
      %14 = sbr.rel (0) target = $region5
    $region4: #{tpu_custom_call.1} parent=1 // pred_region
      %s16 = ssub.s32 1024, 256
      %17 = vsyncadd [#allocation3], %s16
      %s18 = sshll.u32 [#allocation2], 4
      %s19 = int_to_ptr.vmem [resolvable:$true] %s18
      %24 = dma.hbm_to_vmem [thread:$0]  %s0, 256, %s19, [#allocation3], 128, 128, 8
    $region5: #{tpu_custom_call.1} parent=1 // pred_fallthru
      _
    // Predicated region
    $region6: #{tpu_custom_call.1} parent=1 // pred_check
      _
    $region7: #{tpu_custom_call.1} parent=1 // pred_check_branch
      %26 = sbr.rel (0) target = $region9
    $region8: #{tpu_custom_call.1} parent=1 // pred_region
      %s28 = ssub.s32 512, 512
      %29 = vsyncadd [#allocation6], %s28
      %s30 = sshll.u32 [#allocation5], 4
      %s31 = int_to_ptr.vmem [resolvable:$true] %s30
      %36 = dma.hbm_to_vmem [thread:$0]  %s1, 512, %s31, [#allocation6], 128, 128, 8
    $region9: #{tpu_custom_call.1} parent=1 // pred_fallthru
      _
    // Predicated region
    $region10: #{tpu_custom_call.1} parent=1 // pred_check
      _
    $region11: #{tpu_custom_call.1} parent=1 // pred_check_branch
      %38 = sbr.rel (0) target = $region13
    $region12: #{tpu_custom_call.1} parent=1 // pred_region
      _
    $region13: #{tpu_custom_call.1} parent=1 // pred_fallthru
      _
    // Predicated region
    $region14: #{tpu_custom_call.1} parent=1 // pred_check
      _
    $region15: #{tpu_custom_call.1} parent=1 // pred_check_branch
      %40 = sbr.rel (0) target = $region17
    $region16: #{tpu_custom_call.1} parent=1 // pred_region
      %s42 = ssub.s32 512, 512
      %43 = vsyncadd [#allocation6], %s42
      %s44 = sshll.u32 [#allocation7], 4
      %s45 = int_to_ptr.vmem [resolvable:$true] %s44
      %50 = dma.hbm_to_vmem [thread:$0]  %s3, 512, %s45, [#allocation6], 128, 128, 8
    $region17: #{tpu_custom_call.1} parent=1 // pred_fallthru
      _
    // Predicated region
    $region18: #{tpu_custom_call.1} parent=1 // pred_check
      _
    $region19: #{tpu_custom_call.1} parent=1 // pred_check_branch
      %52 = sbr.rel (0) target = $region21
    $region20: #{tpu_custom_call.1} parent=1 // pred_region
      _
    $region21: #{tpu_custom_call.1} parent=1 // pred_fallthru
      _
    // Predicated region
    $region22: #{tpu_custom_call.1} parent=1 // pred_check
      _
    $region23: #{tpu_custom_call.1} parent=1 // pred_check_branch
      %54 = sbr.rel (0) target = $region25
    $region24: #{tpu_custom_call.1} parent=1 // pred_region
      %55 = dma.done [#allocation3], 1024
    $region25: #{tpu_custom_call.1} parent=1 // pred_fallthru
      _
    // Predicated region
    $region26: #{tpu_custom_call.1} parent=1 // pred_check
      _
    $region27: #{tpu_custom_call.1} parent=1 // pred_check_branch
      %57 = sbr.rel (0) target = $region29
    $region28: #{tpu_custom_call.1} parent=1 // pred_region
      %58 = dma.done [#allocation6], 512
    $region29: #{tpu_custom_call.1} parent=1 // pred_fallthru
      _
    // Predicated region
    $region30: #{tpu_custom_call.1} parent=1 // pred_check
      _
    $region31: #{tpu_custom_call.1} parent=1 // pred_check_branch
      %60 = sbr.rel (0) target = $region33
    $region32: #{tpu_custom_call.1} parent=1 // pred_region
      %61 = dma.done [#allocation6], 512
    $region33: #{tpu_custom_call.1} parent=1 // pred_fallthru
      _
    %v62 = vld [vmem:[#allocation2] sm:$0x1]
    %v63 = vld [vmem:[#allocation2 + $0x8] sm:$0x1]
    %v64 = vld [vmem:[#allocation2 + $0x10] sm:$0x1]
    %v65 = vld [vmem:[#allocation2 + $0x18] sm:$0x1]
    %v66 = vld [vmem:[#allocation2 + $0x20] sm:$0x1]
    %v67 = vld [vmem:[#allocation2 + $0x28] sm:$0x1]
    %v68 = vld [vmem:[#allocation2 + $0x30] sm:$0x1]
    %v69 = vld [vmem:[#allocation2 + $0x38] sm:$0x1]
    %v70 = vld [vmem:[#allocation5] sm:$0xff]
    %v71 = vld [vmem:[#allocation5 + $0x8] sm:$0xff]
    %v72 = vld [vmem:[#allocation5 + $0x10] sm:$0xff]
    %v73 = vld [vmem:[#allocation5 + $0x18] sm:$0xff]
    %v74 = vld [vmem:[%s2] sm:$0x1]
    %v76 = vlaneseq
    %v77 = vshrl.u32 %v76, 7
    %v78 = vsub.s32 0, %v77
    %v79 = vrot.slane %v74, %v78
    %v89 = vrot.slane %v63, 7
    %vm90 = vcmask 1041409
    %v91 = vsel %vm90, %v89, %v62
    %v92 = vrot.slane %v64, 6
    %vm93 = vcmask 1042434
    %v94 = vsel %vm93, %v92, %v91
    %v95 = vrot.slane %v65, 5
    %vm96 = vcmask 1043459
    %v97 = vsel %vm96, %v95, %v94
    %v98 = vrot.slane %v66, 4
    %vm99 = vcmask 1044484
    %v100 = vsel %vm99, %v98, %v97
    %v101 = vrot.slane %v67, 3
    %vm102 = vcmask 1045509
    %v103 = vsel %vm102, %v101, %v100
    %v104 = vrot.slane %v68, 2
    %vm105 = vcmask 1046534
    %v106 = vsel %vm105, %v104, %v103
    %v107 = vrot.slane %v69, 1
    %vm108 = vcmask 1047559
    %v109 = vsel %vm108, %v107, %v106
    %vm110 = vcmask 261120
    %v111 = vsel %vm110, %v109, 0
    %113 = vmatprep.subr.mxu0 0.0
    %114 = vmatpush1.msra.mxu0 %v70
    %115 = vmatprep.subr.mxu0 0.0
    %116 = vmatpush1.msra.mxu0 %v71
    %117 = vmatprep.subr.mxu0 0.0
    %118 = vmatpush1.msra.mxu0 %v72
    %119 = vmatprep.subr.mxu0 0.0
    %120 = vmatpush1.msra.mxu0 %v73
    %121 = vmatprep.subr.mxu0 0.0
    %122 = vmatpush1.msra.mxu0 0.0
    %123 = vmatprep.subr.mxu0 0.0
    %124 = vmatpush1.msra.mxu0 0.0
    %125 = vmatprep.subr.mxu0 0.0
    %126 = vmatpush1.msra.mxu0 0.0
    %127 = vmatprep.subr.mxu0 0.0
    %128 = vmatpush1.msra.mxu0 0.0
    %129 = vmatprep.subr.mxu0 0.0
    %130 = vmatpush1.msra.mxu0 0.0
    %131 = vmatprep.subr.mxu0 0.0
    %132 = vmatpush1.msra.mxu0 0.0
    %133 = vmatprep.subr.mxu0 0.0
    %134 = vmatpush1.msra.mxu0 0.0
    %135 = vmatprep.subr.mxu0 0.0
    %136 = vmatpush1.msra.mxu0 0.0
    %137 = vmatprep.subr.mxu0 0.0
    %138 = vmatpush1.msra.mxu0 0.0
    %139 = vmatprep.subr.mxu0 0.0
    %140 = vmatpush1.msra.mxu0 0.0
    %141 = vmatprep.subr.mxu0 0.0
    %142 = vmatpush1.msra.mxu0 0.0
    %143 = vmatprep.subr.mxu0 0.0
    %144 = vmatpush1.msra.mxu0 0.0
    %145 = vmatprep.subr.mxu0 0.0
    %146 = vmatpush1.msra.mxu0 0.0
    %147 = vmatprep.subr.mxu0 0.0
    %148 = vmatpush1.msra.mxu0 0.0
    %149 = vmatprep.subr.mxu0 0.0
    %150 = vmatpush1.msra.mxu0 0.0
    %151 = vmatprep.subr.mxu0 0.0
    %152 = vmatpush1.msra.mxu0 0.0
    %153 = vmatprep.subr.mxu0 0.0
    %154 = vmatpush1.msra.mxu0 0.0
    %155 = vmatprep.subr.mxu0 0.0
    %156 = vmatpush1.msra.mxu0 0.0
    %157 = vmatprep.subr.mxu0 0.0
    %158 = vmatpush1.msra.mxu0 0.0
    %159 = vmatprep.subr.mxu0 0.0
    %160 = vmatpush1.msra.mxu0 0.0
    %161 = vmatprep.subr.mxu0 0.0
    %162 = vmatpush1.msra.mxu0 0.0
    %163 = vmatprep.subr.mxu0 0.0
    %164 = vmatpush1.msra.mxu0 0.0
    %165 = vmatprep.subr.mxu0 0.0
    %166 = vmatpush1.msra.mxu0 0.0
    %167 = vmatprep.subr.mxu0 0.0
    %168 = vmatpush1.msra.mxu0 0.0
    %169 = vmatprep.subr.mxu0 0.0
    %170 = vmatpush1.msra.mxu0 0.0
    %171 = vmatprep.subr.mxu0 0.0
    %172 = vmatpush1.msra.mxu0 0.0
    %173 = vmatprep.subr.mxu0 0.0
    %174 = vmatpush1.msra.mxu0 0.0
    %175 = vmatprep.subr.mxu0 0.0
    %176 = vmatpush1.msra.mxu0 0.0
    %177 = vmatprep.mubr.f32.mxu0 0.0
    %178 = vmatmul.mubr.f32.gmra.mrb[0].mxu0 %v111
    %v179 = vpop.f32.mrb[0].mxu0
    %v180 = vadd.f32 %v79, %v179
    %v181 = vpop.f32.mrb[0].mxu0
    %182 = vdwg.mxu0
    %v183 = vtanh.pop %v180
    %v184 = vld [vmem:[#allocation7] sm:$0xff]
    %v185 = vld [vmem:[#allocation7 + $0x8] sm:$0xff]
    %v186 = vld [vmem:[#allocation7 + $0x10] sm:$0xff]
    %v187 = vld [vmem:[#allocation7 + $0x18] sm:$0xff]
    %v188 = vld [vmem:[%s4] sm:$0x1]
    %v190 = vlaneseq
    %v191 = vshrl.u32 %v190, 7
    %v192 = vsub.s32 0, %v191
    %v193 = vrot.slane %v188, %v192
    %v196 = vsel %vm110, %v183, 0
    %198 = vmatprep.subr.mxu0 0.0
    %199 = vmatpush1.msra.mxu0 %v184
    %200 = vmatprep.subr.mxu0 0.0
    %201 = vmatpush1.msra.mxu0 %v185
    %202 = vmatprep.subr.mxu0 0.0
    %203 = vmatpush1.msra.mxu0 %v186
    %204 = vmatprep.subr.mxu0 0.0
    %205 = vmatpush1.msra.mxu0 %v187
    %206 = vmatprep.subr.mxu0 0.0
    %207 = vmatpush1.msra.mxu0 0.0
    %208 = vmatprep.subr.mxu0 0.0
    %209 = vmatpush1.msra.mxu0 0.0
    %210 = vmatprep.subr.mxu0 0.0
    %211 = vmatpush1.msra.mxu0 0.0
    %212 = vmatprep.subr.mxu0 0.0
    %213 = vmatpush1.msra.mxu0 0.0
    %214 = vmatprep.subr.mxu0 0.0
    %215 = vmatpush1.msra.mxu0 0.0
    %216 = vmatprep.subr.mxu0 0.0
    %217 = vmatpush1.msra.mxu0 0.0
    %218 = vmatprep.subr.mxu0 0.0
    %219 = vmatpush1.msra.mxu0 0.0
    %220 = vmatprep.subr.mxu0 0.0
    %221 = vmatpush1.msra.mxu0 0.0
    %222 = vmatprep.subr.mxu0 0.0
    %223 = vmatpush1.msra.mxu0 0.0
    %224 = vmatprep.subr.mxu0 0.0
    %225 = vmatpush1.msra.mxu0 0.0
    %226 = vmatprep.subr.mxu0 0.0
    %227 = vmatpush1.msra.mxu0 0.0
    %228 = vmatprep.subr.mxu0 0.0
    %229 = vmatpush1.msra.mxu0 0.0
    %230 = vmatprep.subr.mxu0 0.0
    %231 = vmatpush1.msra.mxu0 0.0
    %232 = vmatprep.subr.mxu0 0.0
    %233 = vmatpush1.msra.mxu0 0.0
    %234 = vmatprep.subr.mxu0 0.0
    %235 = vmatpush1.msra.mxu0 0.0
    %236 = vmatprep.subr.mxu0 0.0
    %237 = vmatpush1.msra.mxu0 0.0
    %238 = vmatprep.subr.mxu0 0.0
    %239 = vmatpush1.msra.mxu0 0.0
    %240 = vmatprep.subr.mxu0 0.0
    %241 = vmatpush1.msra.mxu0 0.0
    %242 = vmatprep.subr.mxu0 0.0
    %243 = vmatpush1.msra.mxu0 0.0
    %244 = vmatprep.subr.mxu0 0.0
    %245 = vmatpush1.msra.mxu0 0.0
    %246 = vmatprep.subr.mxu0 0.0
    %247 = vmatpush1.msra.mxu0 0.0
    %248 = vmatprep.subr.mxu0 0.0
    %249 = vmatpush1.msra.mxu0 0.0
    %250 = vmatprep.subr.mxu0 0.0
    %251 = vmatpush1.msra.mxu0 0.0
    %252 = vmatprep.subr.mxu0 0.0
    %253 = vmatpush1.msra.mxu0 0.0
    %254 = vmatprep.subr.mxu0 0.0
    %255 = vmatpush1.msra.mxu0 0.0
    %256 = vmatprep.subr.mxu0 0.0
    %257 = vmatpush1.msra.mxu0 0.0
    %258 = vmatprep.subr.mxu0 0.0
    %259 = vmatpush1.msra.mxu0 0.0
    %260 = vmatprep.subr.mxu0 0.0
    %261 = vmatpush1.msra.mxu0 0.0
    %262 = vmatprep.mubr.f32.mxu0 0.0
    %263 = vmatmul.mubr.f32.gmra.mrb[0].mxu0 %v196
    %v264 = vpop.f32.mrb[0].mxu0
    %v265 = vadd.f32 %v193, %v264
    %v266 = vpop.f32.mrb[0].mxu0
    %267 = vdwg.mxu0
    %268 = vst [vmem:[#allocation8] sm:$0xff] %v265
    // Predicated region
    $region34: #{tpu_custom_call.1} parent=1 // pred_check
      _
    $region35: #{tpu_custom_call.1} parent=1 // pred_check_branch
      %270 = sbr.rel (0) target = $region37
    $region36: #{tpu_custom_call.1} parent=1 // pred_region
      %s272 = ssub.s32 128, 32
      %273 = vsyncadd [#allocation4], %s272
      %s274 = sshll.u32 [#allocation8], 4
      %s275 = int_to_ptr.vmem [resolvable:$true] %s274
      %280 = dma.vmem_to_hbm [thread:$0]  %s275, 32, %s5, [#allocation4], 32, 32, 2
    $region37: #{tpu_custom_call.1} parent=1 // pred_fallthru
      _
    // Predicated region
    $region38: #{tpu_custom_call.1} parent=1 // pred_check
      _
    $region39: #{tpu_custom_call.1} parent=1 // pred_check_branch
      %282 = sbr.rel (0) target = $region41
    $region40: #{tpu_custom_call.1} parent=1 // pred_region
      %283 = dma.done [#allocation4], 128
    $region41: #{tpu_custom_call.1} parent=1 // pred_fallthru
      _
    %284 = vsyncpa [#allocation3], 1
    %285 = vsyncpa [#allocation6], 1
    %286 = vsyncpa [#allocation4], 1

</llo_original>
